<compile_context>
chip_gen: v5e
topology: v5e:2x2
jax: 0.10.0
libtpu: 0.0.40
codegen_flags: <defaults>
</compile_context>

<pallas_src>
import functools

import jax
import jax.numpy as jnp
from jax.experimental import pallas as pl
from jax.experimental.pallas import tpu as pltpu


def _round_up(n, m):
    return ((n + m - 1) // m) * m


# ---------------------------------------------------------------------------
# Kernels
# ---------------------------------------------------------------------------

def _probe_kernel_fused(x_ref, w_ref, b_ref, o_ref):
    """nk == 1: whole feature dim resident; dot + bias straight to output."""
    acc = jnp.dot(x_ref[...], w_ref[...], preferred_element_type=jnp.float32)
    o_ref[...] = (acc + b_ref[...]).astype(o_ref.dtype)


def _probe_kernel_acc(x_ref, w_ref, b_ref, o_ref, acc_ref):
    """nk > 1: K is the trailing 'arbitrary' axis with an f32 accumulator."""
    k = pl.program_id(2)

    @pl.when(k == 0)
    def _init():
        # Seed the accumulator with the bias: removes a VPU add + extra read
        # of acc in the epilogue (relieves v5e's single vst slot).
        acc_ref[...] = jnp.broadcast_to(b_ref[...], acc_ref.shape)

    acc_ref[...] += jnp.dot(x_ref[...], w_ref[...],
                            preferred_element_type=jnp.float32)

    @pl.when(k == pl.num_programs(2) - 1)
    def _finalize():
        o_ref[...] = acc_ref[...].astype(o_ref.dtype)


# ---------------------------------------------------------------------------
# One-time parameter setup (off the step critical path)
# ---------------------------------------------------------------------------

def prepare_probe_params(weight, bias, *, tn_max=512, compute_dtype=jnp.bfloat16):
    """Pad num_classes to a lane-dense width, transpose W to (D, Cp), and cast
    to the MXU-native compute dtype.  Shape-static: call once at parameter
    setup, not per step.

    weight: (C, D) PyTorch-layout weight.   bias: (C,)
    returns w_t (D, Cp) compute_dtype, b_row (1, Cp) f32
    """
    C, D = weight.shape
    Cp = _round_up(C, 128)
    if Cp > tn_max:
        Cp = _round_up(Cp, tn_max)          # class tile divides Cp exactly
    w_t = jnp.zeros((D, Cp), compute_dtype).at[:, :C].set(
        weight.T.astype(compute_dtype))
    b_row = jnp.zeros((1, Cp), jnp.float32).at[:, :C].set(
        bias.astype(jnp.float32))
    return w_t, b_row


# ---------------------------------------------------------------------------
# Forward
# ---------------------------------------------------------------------------

@functools.partial(
    jax.jit,
    static_argnames=("num_classes", "tb_max", "tn_max", "tk_max",
                     "vmem_budget_bytes", "vmem_limit_bytes"))
def probe_layer(x, w_t, b_row, *, num_classes,
                tb_max=1024, tn_max=512, tk_max=2048,
                vmem_budget_bytes=36 << 20, vmem_limit_bytes=48 << 20):
    """nn.Linear(input_dim, num_classes) forward on prepared params.

    x:     (..., D) float (cast to the weight's compute dtype inside)
    w_t:   (D, Cp)  from prepare_probe_params
    b_row: (1, Cp)  f32
    returns (..., num_classes) f32
    """
    orig_lead = x.shape[:-1]
    if x.ndim != 2:
        x = x.reshape(-1, x.shape[-1])
    B, D = x.shape
    Dw, Cp = w_t.shape
    assert D == Dw, "input_dim mismatch between x and prepared weight"

    in_bytes = jnp.dtype(w_t.dtype).itemsize
    out_bytes = 4  # f32 output

    # --- class (N) tiling: bounds VMEM for vocab-sized probes --------------
    TN = min(Cp, tn_max)
    assert Cp % TN == 0, "prepare_probe_params must use the same tn_max"
    nn_ = Cp // TN

    # --- batch (M) tiling: at least 2 'parallel' tiles whenever B > 8 so the
    # batch axis actually shards across both v7x TensorCores; ragged last tile
    # handled by the grid (OOB rows dropped), so NO per-call jnp.pad of x.
    if B <= 8:
        TB = B
    else:
        TB = min(tb_max, _round_up((B + 1) // 2, 8))

    def _fits(tb, tk, with_acc):
        vmem = (2 * tb * tk * in_bytes        # x double-buffer
                + 2 * tk * TN * in_bytes      # W double-buffer
                + 2 * TN * 4                  # bias
                + 2 * tb * TN * out_bytes)    # output double-buffer
        if with_acc:
            vmem += tb * TN * 4               # f32 accumulator scratch
        return vmem <= vmem_budget_bytes

    # --- feature (K) tiling: keep the whole D resident (constant W block
    # index -> W DMA'd once per class tile) whenever it fits; shrink TB first,
    # only then fall back to K tiling with an accumulator.
    TK, nk = D, 1
    while not _fits(TB, TK, False) and TB > 8:
        TB = max(8, _round_up(TB // 2, 8))
    if not _fits(TB, TK, False):
        TK = min(tk_max, _round_up(D, 128))
        while not _fits(TB, TK, True) and TK > 128:
            TK //= 2
        nk = -(-D // TK)

    nb = -(-B // TB)

    # Rare wide-D fallback: zero-pad K so partial K tiles never feed undefined
    # data into the accumulator.
    if nk > 1 and D % TK != 0:
        Dp = nk * TK
        x = jnp.pad(x, ((0, 0), (0, Dp - D)))
        w_t = jnp.pad(w_t, ((0, Dp - D), (0, 0)))

    xc = x.astype(w_t.dtype)  # bf16 compute stream (no-op if already bf16)

    cparams = pltpu.CompilerParams(
        dimension_semantics=(("parallel", "parallel") if nk == 1
                             else ("parallel", "parallel", "arbitrary")),
        vmem_limit_bytes=vmem_limit_bytes,
    )

    if nk == 1:
        out = pl.pallas_call(
            _probe_kernel_fused,
            out_shape=jax.ShapeDtypeStruct((B, Cp), jnp.float32),
            grid=(nb, nn_),
            in_specs=[
                pl.BlockSpec((TB, TK), lambda i, j: (i, 0)),  # x resident over j
                pl.BlockSpec((TK, TN), lambda i, j: (0, j)),  # W^T class tile
                pl.BlockSpec((1, TN), lambda i, j: (0, j)),   # bias tile
            ],
            out_specs=pl.BlockSpec((TB, TN), lambda i, j: (i, j)),
            compiler_params=cparams,
        )(xc, w_t, b_row)
    else:
        out = pl.pallas_call(
            _probe_kernel_acc,
            out_shape=jax.ShapeDtypeStruct((B, Cp), jnp.float32),
            grid=(nb, nn_, nk),
            in_specs=[
                pl.BlockSpec((TB, TK), lambda i, j, k: (i, k)),
                pl.BlockSpec((TK, TN), lambda i, j, k: (k, j)),
                pl.BlockSpec((1, TN), lambda i, j, k: (0, j)),
            ],
            out_specs=pl.BlockSpec((TB, TN), lambda i, j, k: (i, j)),
            scratch_shapes=[pltpu.VMEM((TB, TN), jnp.float32)],
            compiler_params=cparams,
        )(xc, w_t, b_row)

    out = out[:, :num_classes]
    return out.reshape(*orig_lead, num_classes) if orig_lead != (B,) else out


if __name__ == "__main__":
    key = jax.random.PRNGKey(0)
    k_x, k_w, k_b = jax.random.split(key, 3)

    # Small shapes consistent with the module: batch=8, input_dim=32, classes=16.
    B, D, C = 8, 32, 16

    x = jax.random.normal(k_x, (B, D), dtype=jnp.float32)
    bound = 1.0 / (D ** 0.5)  # nn.Linear default uniform init range
    weight = jax.random.uniform(k_w, (C, D), minval=-bound, maxval=bound,
                                dtype=jnp.float32)
    bias = jax.random.uniform(k_b, (C,), minval=-bound, maxval=bound,
                              dtype=jnp.float32)

    # One-time parameter preparation (pad classes to lane-dense, transpose, bf16).
    w_t, b_row = prepare_probe_params(weight, bias)

    out = probe_layer(x, w_t, b_row, num_classes=C)
    out = jax.block_until_ready(out)

    # Reference checks: exact-path bf16 reference (tight) and the true f32
    # nn.Linear reference (loose — bf16 MXU compute is the accepted tradeoff).
    ref_bf16 = (jnp.dot(x.astype(jnp.bfloat16), weight.T.astype(jnp.bfloat16),
                        preferred_element_type=jnp.float32) + bias)
    ref_f32 = x @ weight.T + bias
    assert out.shape == (B, C)
    assert out.dtype == jnp.float32
    assert jnp.allclose(out, ref_bf16, atol=2e-3, rtol=2e-3), "mismatch vs bf16 ref"
    assert jnp.allclose(out, ref_f32, atol=5e-2, rtol=5e-2), "mismatch vs f32 ref"

    print("KERNEL_OK")
</pallas_src>

<mosaic_0001>
module attributes {stable_mosaic.version = 11 : i64} {
  func.func @_probe_kernel_fused(%arg0: i32, %arg1: i32, %arg2: memref<8x32xbf16, #tpu.memory_space<vmem>>, %arg3: memref<32x128xbf16, #tpu.memory_space<vmem>>, %arg4: memref<1x128xf32, #tpu.memory_space<vmem>>, %arg5: memref<8x128xf32, #tpu.memory_space<vmem>>) attributes {dimension_semantics = [#tpu.dimension_semantics<parallel>, #tpu.dimension_semantics<parallel>], iteration_bounds = array<i64: 1, 1>, scalar_prefetch = 0 : i64, scratch_operands = 0 : i64, tpu.core_type = #tpu.core_type<tc>, window_params = [{transform_indices = @transform_0, window_bounds = array<i64: 8, 32>}, {transform_indices = @transform_1, window_bounds = array<i64: 32, 128>}, {transform_indices = @transform_2, window_bounds = array<i64: 1, 128>}, {transform_indices = @transform_3, window_bounds = array<i64: 8, 128>}]} {
    %c0 = arith.constant 0 : index
    %c0_0 = arith.constant 0 : index
    %0 = vector.load %arg2[%c0, %c0_0] : memref<8x32xbf16, #tpu.memory_space<vmem>>, vector<8x32xbf16>
    %c0_1 = arith.constant 0 : index
    %c0_2 = arith.constant 0 : index
    %1 = vector.load %arg3[%c0_1, %c0_2] : memref<32x128xbf16, #tpu.memory_space<vmem>>, vector<32x128xbf16>
    %cst = arith.constant dense<0.000000e+00> : vector<8x128xf32>
    %2 = tpu.matmul %0, %1, %cst {dimension_numbers = #tpu.dot_dimension_numbers<[1], [0], [0], [1], [0, 0, 1, 1], [], []>} : vector<8x32xbf16>, vector<32x128xbf16>, vector<8x128xf32> -> vector<8x128xf32>
    %c0_3 = arith.constant 0 : index
    %c0_4 = arith.constant 0 : index
    %3 = vector.load %arg4[%c0_3, %c0_4] : memref<1x128xf32, #tpu.memory_space<vmem>>, vector<1x128xf32>
    %4 = vector.broadcast %3 : vector<1x128xf32> to vector<8x128xf32>
    %5 = arith.addf %2, %4 : vector<8x128xf32>
    %c0_5 = arith.constant 0 : index
    %c0_6 = arith.constant 0 : index
    %6 = vector.load %arg5[%c0_5, %c0_6] : memref<8x128xf32, #tpu.memory_space<vmem>>, vector<8x128xf32>
    tpu.vector_store %arg5[%c0_5, %c0_6], %5 {strides = array<i32>} : memref<8x128xf32, #tpu.memory_space<vmem>>, vector<8x128xf32>,
    return
  }
  func.func @transform_0(%arg0: i32, %arg1: i32) -> (i32, i32) {
    %c0_i32 = arith.constant 0 : i32
    %c0_i32_0 = arith.constant 0 : i32
    return %arg0, %c0_i32 : i32, i32
  }
  func.func @transform_1(%arg0: i32, %arg1: i32) -> (i32, i32) {
    %c0_i32 = arith.constant 0 : i32
    %c0_i32_0 = arith.constant 0 : i32
    return %c0_i32, %arg1 : i32, i32
  }
  func.func @transform_2(%arg0: i32, %arg1: i32) -> (i32, i32) {
    %c0_i32 = arith.constant 0 : i32
    %c0_i32_0 = arith.constant 0 : i32
    return %c0_i32, %arg1 : i32, i32
  }
  func.func @transform_3(%arg0: i32, %arg1: i32) -> (i32, i32) {
    %c0_i32 = arith.constant 0 : i32
    return %arg0, %arg1 : i32, i32
  }
}

</mosaic_0001>

<llo_original>
// kernel: probe_layer.1
$region0: #{probe_layer.1}
  #allocation0 [shape = 'u32[]', space=smem, size = 0x4, offset = 0x4, fixed_abs, tag = 'smem constant byte address 0x4 - core index']
  #allocation1 [shape = 'u32[72,128]{1,0:T(1,128)}', space=vmem, size = 0x9000, scoped, tag = 'internal scratch']
  %s0 = inlined_call_operand.vmem [shape: bf16[8,32], index: 0, kind: input, shape index: {}]
  %s1 = inlined_call_operand.hbm [shape: bf16[32,128], index: 1, kind: input, shape index: {}]
  %s2 = inlined_call_operand.vmem [shape: f32[1,128], index: 2, kind: input, shape index: {}]
  %s3 = inlined_call_operand.hbm [shape: f32[8,128], index: 3, kind: output, shape index: {}]
  %s4 = sld [smem:[#allocation0]]
  $region26: #{probe_layer.1} parent=0
    _
  %s6 = ssub.s32 1, %s4
  %s7 = scalar_select 0, %s6, %s4
  $region1: #{probe_layer.1} parent=0
    #allocation2 [shape = 'u8[8192]{0}', space=vmem, size = 0x2000, scoped, tag = 'input window, operand 1, single buffered']
    #allocation3 [shape = 's32[1]{0}', space=sflag, size = 0x4, scoped, tag = 'scoped memory for probe_layer.1']
    #allocation4 [shape = 's32[1]{0}', space=sflag, size = 0x4, scoped, tag = 'scoped memory for probe_layer.1']
    #allocation5 [shape = 'u8[4096]{0}', space=vmem, size = 0x1000, scoped, tag = 'output window, operand 0, single buffered']
    %8 = vsyncpa [#allocation3], 0
    %9 = vsyncpa [#allocation4], 0
    // Predicated region
    $region2: #{probe_layer.1} parent=1 // pred_check
      _
    $region3: #{probe_layer.1} parent=1 // pred_check_branch
      %11 = sbr.rel (0) target = $region5
    $region4: #{probe_layer.1} parent=1 // pred_region
      _
    $region5: #{probe_layer.1} parent=1 // pred_fallthru
      _
    // Predicated region
    $region6: #{probe_layer.1} parent=1 // pred_check
      _
    $region7: #{probe_layer.1} parent=1 // pred_check_branch
      %13 = sbr.rel (0) target = $region9
    $region8: #{probe_layer.1} parent=1 // pred_region
      %15 = vsyncadd [#allocation3], 0
      %s16 = sshll.u32 %s1, 4
      %s17 = int_to_ptr.hbm [resolvable:$true] %s16
      %s18 = sshll.u32 [#allocation2], 4
      %s19 = int_to_ptr.vmem [resolvable:$true] %s18
      %24 = dma.hbm_to_vmem [thread:$0]  %s17, 256, %s19, [#allocation3], 64, 64, 4
    $region9: #{probe_layer.1} parent=1 // pred_fallthru
      _
    // Predicated region
    $region10: #{probe_layer.1} parent=1 // pred_check
      _
    $region11: #{probe_layer.1} parent=1 // pred_check_branch
      %26 = sbr.rel (0) target = $region13
    $region12: #{probe_layer.1} parent=1 // pred_region
      _
    $region13: #{probe_layer.1} parent=1 // pred_fallthru
      _
    // Predicated region
    $region14: #{probe_layer.1} parent=1 // pred_check
      _
    $region15: #{probe_layer.1} parent=1 // pred_check_branch
      %28 = sbr.rel (0) target = $region17
    $region16: #{probe_layer.1} parent=1 // pred_region
      %30 = dma.done [#allocation3], 256
    $region17: #{probe_layer.1} parent=1 // pred_fallthru
      _
    %v32 = vld [vmem:[%s0] sm:$0xf]
    %v33 = vld [vmem:[#allocation2] sm:$0xf]
    %v34 = vld [vmem:[#allocation2 + $0x4] sm:$0xf]
    %v35 = vld [vmem:[#allocation2 + $0x8] sm:$0xf]
    %v36 = vld [vmem:[#allocation2 + $0xc] sm:$0xf]
    %v37 = vld [vmem:[%s2] sm:$0x1]
    %v39 = vperm.slane %v37, 0
    %v45 = vunpack.c.l.b16 %v33
    %v46 = vunpack.c.l.b16 %v34
    %v47 = vunpack.c.l.b16 %v35
    %v48 = vunpack.c.l.b16 %v36
    %v49 = vpack.c.b16 %v46, %v45
    %v50 = vpack.c.b16 %v48, %v47
    %vm53 = vcmask 261120
    %v55 = vsel %vm53, %v32, 0
    %57 = vmatpush.bf16.msra.mxu0 0
    %58 = vmatpush.bf16.msra.mxu0 0
    %59 = vmatpush.bf16.msra.mxu0 0
    %60 = vmatpush.bf16.msra.mxu0 0
    %61 = vmatpush.bf16.msra.mxu0 0
    %62 = vmatpush.bf16.msra.mxu0 0
    %63 = vmatpush.bf16.msra.mxu0 %v50
    %64 = vmatpush.bf16.msra.mxu0 %v49
    %65 = vmatmul.bf16.gmra.mxu0 %v55
    %v66 = vpop.f32.mrf.mxu0
    %v67 = vadd.f32 %v39, %v66
    %v68 = vpop.f32.mrf.mxu0
    %69 = vdwg.mxu0
    %70 = vst [vmem:[#allocation5] sm:$0xff] %v67
    // Predicated region
    $region18: #{probe_layer.1} parent=1 // pred_check
      _
    $region19: #{probe_layer.1} parent=1 // pred_check_branch
      %72 = sbr.rel (0) target = $region21
    $region20: #{probe_layer.1} parent=1 // pred_region
      %74 = vsyncadd [#allocation4], 0
      %s76 = sshll.u32 [#allocation5], 4
      %s77 = int_to_ptr.vmem [resolvable:$true] %s76
      %s78 = sshll.u32 %s3, 4
      %s79 = int_to_ptr.hbm [resolvable:$true] %s78
      %81 = dma.vmem_to_hbm [thread:$0]  %s77, 128, %s79, [#allocation4]
    $region21: #{probe_layer.1} parent=1 // pred_fallthru
      _
    // Predicated region
    $region22: #{probe_layer.1} parent=1 // pred_check
      _
    $region23: #{probe_layer.1} parent=1 // pred_check_branch
      %83 = sbr.rel (0) target = $region25
    $region24: #{probe_layer.1} parent=1 // pred_region
      %85 = dma.done [#allocation4], 128
    $region25: #{probe_layer.1} parent=1 // pred_fallthru
      _
    %86 = vsyncpa [#allocation3], 1
    %87 = vsyncpa [#allocation4], 1

</llo_original>
